<compile_context>
chip_gen: v5e
topology: v5e:2x2
jax: 0.10.0
libtpu: 0.0.40
codegen_flags: <defaults>
</compile_context>

<pallas_src>
import jax
import jax.numpy as jnp
from jax.experimental import pallas as pl
from jax.experimental.pallas import tpu as pltpu

INPUT_SIZE = 8
HIDDEN = 64
OUT = 1


def mlp_kernel(x2_ref, w1b_ref, b1b_ref, w2b_ref, b2_ref, o_ref):
    """One packed batch tile (16 samples per 128-lane row).

    x2_ref : (R, 128)    VMEM  packed inputs: row r = [s0 f0..7, s1 f0..7, ...]
    w1b_ref: (128, 1024) VMEM  block-diagonal 16x replication of w1.T
    b1b_ref: (1, 1024)   VMEM  b1 tiled 16x
    w2b_ref: (1024, 16)  VMEM  block-diagonal 16x replication of w2.T
    b2_ref : (1, 1)      SMEM  fc2 bias scalar
    o_ref  : (R, 16)     VMEM  packed outputs: o[r, j] = y[16*r + j]
    """
    # fc1 on the MXU: (R,128) @ (128,1024) -> (R,1024), f32 accumulation.
    h = jnp.dot(x2_ref[...], w1b_ref[...], preferred_element_type=jnp.float32)
    # Single fused VPU pass over the hidden tile: bias + ReLU.
    h = jnp.maximum(h + b1b_ref[...], 0.0)
    # fc2 on the MXU as well (was VPU mul + XLU reduce): (R,1024) @ (1024,16).
    y = jnp.dot(h, w2b_ref[...], preferred_element_type=jnp.float32)
    o_ref[...] = (y + b2_ref[0, 0]).astype(o_ref.dtype)


def _dense_forward(x, w1, b1, w2, b2):
    """Plain-XLA reference / fallback: relu(x @ w1.T + b1) @ w2.T + b2."""
    return jnp.maximum(x @ w1.T + b1, 0.0) @ w2.T + b2


def net_forward(x, w1, b1, w2, b2, *, block_rows=2048):
    """Pallas forward for Net.  x: (B, IN) f32; w1: (H, IN); b1: (H,);
    w2: (OUT, H); b2: (OUT,).  Returns (B, OUT) f32."""
    B, IN = x.shape
    H = w1.shape[0]
    OUTF = w2.shape[0]

    if 128 % IN != 0 or OUTF != 1:
        # TODO(synk): the 128-lane packing trick assumes input_size divides 128
        # and a single regression output; fall back to plain XLA otherwise.
        return _dense_forward(x, w1, b1, w2, b2)

    pack = 128 // IN                       # samples packed per 128-lane row (16)
    B16 = (B // pack) * pack
    if B16 == 0:
        return _dense_forward(x, w1, b1, w2, b2)

    rows = B16 // pack
    lane_k = pack * IN                     # 128
    lane_h = pack * H                      # 1024

    # Zero-relayout view of x: contiguous reshape, no transpose, no pad.
    x_main = x if B16 == B else x[:B16]
    x2 = x_main.reshape(rows, lane_k)

    # Block-diagonal replicated weights (~0.5 MiB + 64 KiB; built per call,
    # would be cached per weight update in a training loop).
    eye = jnp.eye(pack, dtype=jnp.float32)
    w1b = jnp.kron(eye, w1.T.astype(jnp.float32))            # (128, 1024)
    b1b = jnp.tile(b1.astype(jnp.float32), pack).reshape(1, lane_h)
    w2b = jnp.kron(eye, w2.T.astype(jnp.float32))            # (1024, 16)
    b2s = b2.reshape(1, 1).astype(jnp.float32)

    # Row-tile choice: big tiles for bandwidth, multiple of 8 (layout rule),
    # and >= 2 grid steps when the batch allows so both v7x TCs get work.
    R = min(block_rows, rows)
    if R < rows:
        R = max(8, (R // 8) * 8)
    if pl.cdiv(rows, R) < 2 and rows >= 16:
        R = max(8, (((rows + 1) // 2) + 7) // 8 * 8)
    grid = (pl.cdiv(rows, R),)

    flops = 2 * rows * (lane_k * lane_h + lane_h * pack)
    bytes_accessed = 4 * (rows * lane_k + rows * pack
                          + lane_k * lane_h + lane_h + lane_h * pack + 1)

    y2 = pl.pallas_call(
        mlp_kernel,
        out_shape=jax.ShapeDtypeStruct((rows, pack), jnp.float32),
        grid_spec=pltpu.PrefetchScalarGridSpec(
            num_scalar_prefetch=0,
            grid=grid,
            in_specs=[
                pl.BlockSpec((R, lane_k), lambda i: (i, 0)),        # packed x tile
                pl.BlockSpec((lane_k, lane_h), lambda i: (0, 0)),   # w1 block-diag
                pl.BlockSpec((1, lane_h), lambda i: (0, 0)),        # b1 tiled
                pl.BlockSpec((lane_h, pack), lambda i: (0, 0)),     # w2 block-diag
                pl.BlockSpec(memory_space=pltpu.MemorySpace.SMEM),  # b2 scalar
            ],
            out_specs=pl.BlockSpec((R, pack), lambda i: (i, 0)),
        ),
        compiler_params=pltpu.CompilerParams(
            dimension_semantics=("parallel",),
            vmem_limit_bytes=48 * 1024 * 1024,
        ),
        cost_estimate=pl.CostEstimate(
            flops=flops, transcendentals=0, bytes_accessed=bytes_accessed),
    )(x2, w1b, b1b, w2b, b2s)

    y_main = y2.reshape(B16, OUTF)          # contiguous view, no relayout
    if B16 == B:
        return y_main
    y_tail = _dense_forward(x[B16:], w1, b1, w2, b2)   # < pack samples
    return jnp.concatenate([y_main, y_tail], axis=0)


def init_params(key, input_size=INPUT_SIZE, hidden=HIDDEN, out=OUT):
    """Deterministic init mimicking PyTorch Linear default (uniform +/-1/sqrt(fan_in)),
    stored in PyTorch layouts: w=(out, in), b=(out,)."""
    k1, k2, k3, k4 = jax.random.split(key, 4)
    bound1 = 1.0 / jnp.sqrt(input_size)
    bound2 = 1.0 / jnp.sqrt(hidden)
    w1 = jax.random.uniform(k1, (hidden, input_size), jnp.float32, -bound1, bound1)
    b1 = jax.random.uniform(k2, (hidden,), jnp.float32, -bound1, bound1)
    w2 = jax.random.uniform(k3, (out, hidden), jnp.float32, -bound2, bound2)
    b2 = jax.random.uniform(k4, (out,), jnp.float32, -bound2, bound2)
    return w1, b1, w2, b2


if __name__ == "__main__":
    key = jax.random.PRNGKey(0)
    kx, kparam = jax.random.split(key)

    batch = 256
    x = jax.random.normal(kx, (batch, INPUT_SIZE), jnp.float32)
    w1, b1, w2, b2 = init_params(kparam)

    # Call the Pallas path directly so the kernel itself is exercised
    # (batch=256 -> 16 packed rows -> 2 grid steps of 8 rows each).
    y = net_forward(x, w1, b1, w2, b2)
    y = jax.block_until_ready(y)

    # Pure-JAX reference of the same PyTorch forward (Linear -> ReLU -> Linear).
    ref = _dense_forward(x, w1, b1, w2, b2)
    assert y.shape == (batch, OUT)
    assert jnp.allclose(y, ref, atol=1e-5, rtol=1e-5)

    print("KERNEL_OK")
</pallas_src>

<mosaic_0001>
module attributes {stable_mosaic.version = 11 : i64} {
  func.func @mlp_kernel(%arg0: i32, %arg1: memref<8x128xf32, #tpu.memory_space<vmem>>, %arg2: memref<128x1024xf32, #tpu.memory_space<vmem>>, %arg3: memref<1x1024xf32, #tpu.memory_space<vmem>>, %arg4: memref<1024x16xf32, #tpu.memory_space<vmem>>, %arg5: memref<1x1xf32, #tpu.memory_space<smem>>, %arg6: memref<8x16xf32, #tpu.memory_space<vmem>>) attributes {dimension_semantics = [#tpu.dimension_semantics<parallel>], iteration_bounds = array<i64: 2>, scalar_prefetch = 0 : i64, scratch_operands = 0 : i64, tpu.core_type = #tpu.core_type<tc>, window_params = [{transform_indices = @transform_0, window_bounds = array<i64: 8, 128>}, {pipeline_mode = #tpu.pipeline_mode<synchronous>, transform_indices = @transform_1, window_bounds = array<i64: 128, 1024>}, {pipeline_mode = #tpu.pipeline_mode<synchronous>, transform_indices = @transform_2, window_bounds = array<i64: 1, 1024>}, {pipeline_mode = #tpu.pipeline_mode<synchronous>, transform_indices = @transform_3, window_bounds = array<i64: 1024, 16>}, {transform_indices = @transform_4, window_bounds = array<i64: 1, 1>}, {transform_indices = @transform_5, window_bounds = array<i64: 8, 16>}]} {
    %c0 = arith.constant 0 : index
    %c0_0 = arith.constant 0 : index
    %0 = vector.load %arg1[%c0, %c0_0] : memref<8x128xf32, #tpu.memory_space<vmem>>, vector<8x128xf32>
    %c0_1 = arith.constant 0 : index
    %c0_2 = arith.constant 0 : index
    %1 = vector.load %arg2[%c0_1, %c0_2] : memref<128x1024xf32, #tpu.memory_space<vmem>>, vector<128x1024xf32>
    %cst = arith.constant dense<0.000000e+00> : vector<8x1024xf32>
    %2 = tpu.matmul %0, %1, %cst {dimension_numbers = #tpu.dot_dimension_numbers<[1], [0], [0], [1], [0, 0, 1, 1], [], []>} : vector<8x128xf32>, vector<128x1024xf32>, vector<8x1024xf32> -> vector<8x1024xf32>
    %c0_3 = arith.constant 0 : index
    %c0_4 = arith.constant 0 : index
    %3 = vector.load %arg3[%c0_3, %c0_4] : memref<1x1024xf32, #tpu.memory_space<vmem>>, vector<1x1024xf32>
    %4 = vector.broadcast %3 : vector<1x1024xf32> to vector<8x1024xf32>
    %5 = arith.addf %2, %4 : vector<8x1024xf32>
    %cst_5 = arith.constant 0.000000e+00 : f32
    %6 = vector.broadcast %cst_5 : f32 to vector<8x1024xf32>
    %7 = arith.maximumf %5, %6 : vector<8x1024xf32>
    %c0_6 = arith.constant 0 : index
    %c0_7 = arith.constant 0 : index
    %8 = vector.load %arg4[%c0_6, %c0_7] : memref<1024x16xf32, #tpu.memory_space<vmem>>, vector<1024x16xf32>
    %cst_8 = arith.constant dense<0.000000e+00> : vector<8x16xf32>
    %9 = tpu.matmul %7, %8, %cst_8 {dimension_numbers = #tpu.dot_dimension_numbers<[1], [0], [0], [1], [0, 0, 1, 1], [], []>} : vector<8x1024xf32>, vector<1024x16xf32>, vector<8x16xf32> -> vector<8x16xf32>
    %c0_9 = arith.constant 0 : index
    %c0_10 = arith.constant 0 : index
    %10 = memref.load %arg5[%c0_9, %c0_10] : memref<1x1xf32, #tpu.memory_space<smem>>
    %11 = vector.broadcast %10 : f32 to vector<8x16xf32>
    %12 = arith.addf %9, %11 : vector<8x16xf32>
    %c0_11 = arith.constant 0 : index
    %c0_12 = arith.constant 0 : index
    %13 = vector.load %arg6[%c0_11, %c0_12] : memref<8x16xf32, #tpu.memory_space<vmem>>, vector<8x16xf32>
    tpu.vector_store %arg6[%c0_11, %c0_12], %12 {strides = array<i32>} : memref<8x16xf32, #tpu.memory_space<vmem>>, vector<8x16xf32>,
    return
  }
  func.func @transform_0(%arg0: i32) -> (i32, i32) {
    %c0_i32 = arith.constant 0 : i32
    %c0_i32_0 = arith.constant 0 : i32
    return %arg0, %c0_i32 : i32, i32
  }
  func.func @transform_1(%arg0: i32) -> (i32, i32) {
    %c0_i32 = arith.constant 0 : i32
    %c0_i32_0 = arith.constant 0 : i32
    %c0_i32_1 = arith.constant 0 : i32
    return %c0_i32, %c0_i32_0 : i32, i32
  }
  func.func @transform_2(%arg0: i32) -> (i32, i32) {
    %c0_i32 = arith.constant 0 : i32
    %c0_i32_0 = arith.constant 0 : i32
    %c0_i32_1 = arith.constant 0 : i32
    return %c0_i32, %c0_i32_0 : i32, i32
  }
  func.func @transform_3(%arg0: i32) -> (i32, i32) {
    %c0_i32 = arith.constant 0 : i32
    %c0_i32_0 = arith.constant 0 : i32
    %c0_i32_1 = arith.constant 0 : i32
    return %c0_i32, %c0_i32_0 : i32, i32
  }
  func.func @transform_4(%arg0: i32) -> (i32, i32) {
    %c0_i32 = arith.constant 0 : i32
    %c0_i32_0 = arith.constant 0 : i32
    %c0_i32_1 = arith.constant 0 : i32
    return %c0_i32, %c0_i32_0 : i32, i32
  }
  func.func @transform_5(%arg0: i32) -> (i32, i32) {
    %c0_i32 = arith.constant 0 : i32
    %c0_i32_0 = arith.constant 0 : i32
    return %arg0, %c0_i32 : i32, i32
  }
}

</mosaic_0001>

<llo_original>
// kernel: tpu_custom_call.1
$region0: #{tpu_custom_call.1}
  #allocation0 [shape = 'u32[]', space=smem, size = 0x4, offset = 0x4, fixed_abs, tag = 'smem constant byte address 0x4 - core index']
  #allocation1 [shape = 'u32[72,128]{1,0:T(1,128)}', space=vmem, size = 0x9000, scoped, tag = 'internal scratch']
  #allocation2 [shape = 'f32[1,1]{1,0:T(1,128)S(6)}', space=smem, size = 0x200, scoped, tag = 'scoped memory for tpu_custom_call.1']
  %s0 = inlined_call_operand.vmem [shape: f32[16,128], index: 0, kind: input, shape index: {}]
  %s1 = inlined_call_operand.vmem [shape: f32[128,1024], index: 1, kind: input, shape index: {}]
  %s2 = inlined_call_operand.vmem [shape: f32[1,1024], index: 2, kind: input, shape index: {}]
  %s3 = inlined_call_operand.vmem [shape: f32[1024,16], index: 3, kind: input, shape index: {}]
  %s4 = inlined_call_operand.<no memory space> [shape: f32[1,1], index: 4, kind: input, shape index: {}]
  %s5 = inlined_call_operand.hbm [shape: f32[16,16], index: 5, kind: output, shape index: {}]
  %s6 = sld [smem:[#allocation0]]
  $region53: #{tpu_custom_call.1} parent=0
    _
  %s8 = ssub.s32 1, %s6
  %s9 = scalar_select 0, %s8, %s6
  %10 = sst [smem:[#allocation2]] %s4
  $region1: #{tpu_custom_call.1} parent=0
    #allocation3 [shape = 'u8[8192]{0}', space=vmem, size = 0x2000, scoped, tag = 'output window, operand 0']
    #allocation4 [shape = 's32[2]{0}', space=sflag, size = 0x8, scoped, tag = 'scoped memory for tpu_custom_call.1']
    %11 = vsyncpa [#allocation4], 0
    %s12 = scalar_lea.sflag [#allocation4], 1
    %13 = vsyncpa %s12, 0
    loop: start=0, step=1, limit=4
    $region2: #{tpu_custom_call.1} parent=1 // loop_pre_header
      _
    $region3: #{tpu_custom_call.1} parent=1 // loop_header
      %s15 = sphi 0, %s19
      %p16 = scmp.ge.s32.totalorder %s15, 4
      %s25 = sphi 0, %s27
      %s28 = sphi 0, %s25
      %s29 = sphi 0, %s28
      %s45 = sphi 0, %s29
      %s49 = sphi 0, %s49
      %s51 = sphi 0, %s49
      %s52 = sphi 0, %s51
      %s66 = sphi 0, %s52
      %s70 = sphi 0, %s70
      %s72 = sphi 0, %s70
      %s73 = sphi 0, %s72
      %s87 = sphi 0, %s73
      %s91 = sphi 0, %s91
      %s93 = sphi 0, %s91
      %s94 = sphi 0, %s93
      %s108 = sphi 0, %s94
      %s112 = sphi 0, %s112
      %s114 = sphi 0, %s112
      %s115 = sphi 0, %s114
      %s129 = sphi 0, %s115
      %s135 = sphi 0, %s137
      %s138 = sphi 0, %s135
      %s139 = sphi 0, %s138
      %s155 = sphi 0, %s139
    $region4: #{tpu_custom_call.1} parent=1 // loop_header_branch
      %18 = sbr.rel (%p16) target = $region8
    $region5: #{tpu_custom_call.1} parent=1 // loop_body
      %s20 = ssub.s32 %s15, 1
      %s21 = ssub.s32 %s15, 2
      %s22 = sadd.s32 %s15, 1
      %s23 = ssub.s32 %s15, %s22
      %p24 = scmp.eq.s32.totalorder %s23, 0
      %s26 = sadd.s32 %s25, 1
      %s27 = scalar_select %p24, %s25, %s26
      %p30 = pneg %p24
      %p31 = scmp.eq.s32.totalorder %s15, 1
      %p32 = por %p30, %p31
      %p33 = scmp.ne.s32.totalorder %s25, %s28
      %p34 = scmp.eq.s32.totalorder %s15, 0
      %p35 = por %p33, %p34
      %p36 = scmp.ne.s32.totalorder %s25, %s28
      %p37 = scmp.eq.s32.totalorder %s20, 1
      %p38 = por %p36, %p37
      %p39 = scmp.ne.s32.totalorder %s28, %s29
      %p40 = scmp.eq.s32.totalorder %s20, 0
      %p41 = por %p39, %p40
      %p42 = scmp.ne.s32.totalorder %s28, %s29
      %p43 = scmp.eq.s32.totalorder %s21, 1
      %p44 = por %p42, %p43
      %p46 = scmp.ne.s32.totalorder %s29, %s45
      %p47 = scmp.eq.s32.totalorder %s21, 0
      %p48 = por %p46, %p47
      %s50 = sadd.s32 %s49, 1
      %p53 = scmp.eq.s32.totalorder %s15, 1
      %p54 = scmp.ne.s32.totalorder %s49, %s51
      %p55 = scmp.eq.s32.totalorder %s15, 0
      %p56 = por %p54, %p55
      %p57 = scmp.ne.s32.totalorder %s49, %s51
      %p58 = scmp.eq.s32.totalorder %s20, 1
      %p59 = por %p57, %p58
      %p60 = scmp.ne.s32.totalorder %s51, %s52
      %p61 = scmp.eq.s32.totalorder %s20, 0
      %p62 = por %p60, %p61
      %p63 = scmp.ne.s32.totalorder %s51, %s52
      %p64 = scmp.eq.s32.totalorder %s21, 1
      %p65 = por %p63, %p64
      %p67 = scmp.ne.s32.totalorder %s52, %s66
      %p68 = scmp.eq.s32.totalorder %s21, 0
      %p69 = por %p67, %p68
      %s71 = sadd.s32 %s70, 1
      %p74 = scmp.eq.s32.totalorder %s15, 1
      %p75 = scmp.ne.s32.totalorder %s70, %s72
      %p76 = scmp.eq.s32.totalorder %s15, 0
      %p77 = por %p75, %p76
      %p78 = scmp.ne.s32.totalorder %s70, %s72
      %p79 = scmp.eq.s32.totalorder %s20, 1
      %p80 = por %p78, %p79
      %p81 = scmp.ne.s32.totalorder %s72, %s73
      %p82 = scmp.eq.s32.totalorder %s20, 0
      %p83 = por %p81, %p82
      %p84 = scmp.ne.s32.totalorder %s72, %s73
      %p85 = scmp.eq.s32.totalorder %s21, 1
      %p86 = por %p84, %p85
      %p88 = scmp.ne.s32.totalorder %s73, %s87
      %p89 = scmp.eq.s32.totalorder %s21, 0
      %p90 = por %p88, %p89
      %s92 = sadd.s32 %s91, 1
      %p95 = scmp.eq.s32.totalorder %s15, 1
      %p96 = scmp.ne.s32.totalorder %s91, %s93
      %p97 = scmp.eq.s32.totalorder %s15, 0
      %p98 = por %p96, %p97
      %p99 = scmp.ne.s32.totalorder %s91, %s93
      %p100 = scmp.eq.s32.totalorder %s20, 1
      %p101 = por %p99, %p100
      %p102 = scmp.ne.s32.totalorder %s93, %s94
      %p103 = scmp.eq.s32.totalorder %s20, 0
      %p104 = por %p102, %p103
      %p105 = scmp.ne.s32.totalorder %s93, %s94
      %p106 = scmp.eq.s32.totalorder %s21, 1
      %p107 = por %p105, %p106
      %p109 = scmp.ne.s32.totalorder %s94, %s108
      %p110 = scmp.eq.s32.totalorder %s21, 0
      %p111 = por %p109, %p110
      %s113 = sadd.s32 %s112, 1
      %p116 = scmp.eq.s32.totalorder %s15, 1
      %p117 = scmp.ne.s32.totalorder %s112, %s114
      %p118 = scmp.eq.s32.totalorder %s15, 0
      %p119 = por %p117, %p118
      %p120 = scmp.ne.s32.totalorder %s112, %s114
      %p121 = scmp.eq.s32.totalorder %s20, 1
      %p122 = por %p120, %p121
      %p123 = scmp.ne.s32.totalorder %s114, %s115
      %p124 = scmp.eq.s32.totalorder %s20, 0
      %p125 = por %p123, %p124
      %p126 = scmp.ne.s32.totalorder %s114, %s115
      %p127 = scmp.eq.s32.totalorder %s21, 1
      %p128 = por %p126, %p127
      %p130 = scmp.ne.s32.totalorder %s115, %s129
      %p131 = scmp.eq.s32.totalorder %s21, 0
      %p132 = por %p130, %p131
      %s133 = ssub.s32 %s15, %s22
      %p134 = scmp.eq.s32.totalorder %s133, 0
      %s136 = sadd.s32 %s135, 1
      %s137 = scalar_select %p134, %s135, %s136
      %p140 = pneg %p134
      %p141 = scmp.eq.s32.totalorder %s15, 1
      %p142 = por %p140, %p141
      %p143 = scmp.ne.s32.totalorder %s135, %s138
      %p144 = scmp.eq.s32.totalorder %s15, 0
      %p145 = por %p143, %p144
      %p146 = scmp.ne.s32.totalorder %s135, %s138
      %p147 = scmp.eq.s32.totalorder %s20, 1
      %p148 = por %p146, %p147
      %p149 = scmp.ne.s32.totalorder %s138, %s139
      %p150 = scmp.eq.s32.totalorder %s20, 0
      %p151 = por %p149, %p150
      %p152 = scmp.ne.s32.totalorder %s138, %s139
      %p153 = scmp.eq.s32.totalorder %s21, 1
      %p154 = por %p152, %p153
      %p156 = scmp.ne.s32.totalorder %s139, %s155
      %p157 = scmp.eq.s32.totalorder %s21, 0
      %p158 = por %p156, %p157
      %p159 = scmp.le.s32.totalorder 1, %s15
      %p160 = scmp.lt.s32.totalorder %s15, 3
      %p161 = pnand %p159, %p160
      %p162 = pneg %p161
      // Predicated region
      $region9: #{tpu_custom_call.1} parent=5 // pred_check
        _
      $region10: #{tpu_custom_call.1} parent=5 // pred_check_branch
        %164 = sbr.rel (%p161) target = $region12
      $region11: #{tpu_custom_call.1} parent=5 // pred_region
        %s165 = ssub.s32 %s15, 1
        // Predicated region
        $region13: #{tpu_custom_call.1} parent=11 // pred_check
          %p166 = pneg %p62
        $region14: #{tpu_custom_call.1} parent=11 // pred_check_branch
          %168 = sbr.rel (%p166) target = $region16
        $region15: #{tpu_custom_call.1} parent=11 // pred_region
          _
        $region16: #{tpu_custom_call.1} parent=11 // pred_fallthru
          _
        // Predicated region
        $region17: #{tpu_custom_call.1} parent=11 // pred_check
          %p169 = pneg %p83
        $region18: #{tpu_custom_call.1} parent=11 // pred_check_branch
          %171 = sbr.rel (%p169) target = $region20
        $region19: #{tpu_custom_call.1} parent=11 // pred_region
          _
        $region20: #{tpu_custom_call.1} parent=11 // pred_fallthru
          _
        // Predicated region
        $region21: #{tpu_custom_call.1} parent=11 // pred_check
          %p172 = pneg %p104
        $region22: #{tpu_custom_call.1} parent=11 // pred_check_branch
          %174 = sbr.rel (%p172) target = $region24
        $region23: #{tpu_custom_call.1} parent=11 // pred_region
          _
        $region24: #{tpu_custom_call.1} parent=11 // pred_fallthru
          _
        // Predicated region
        $region25: #{tpu_custom_call.1} parent=11 // pred_check
          %p175 = pneg %p125
        $region26: #{tpu_custom_call.1} parent=11 // pred_check_branch
          %177 = sbr.rel (%p175) target = $region28
        $region27: #{tpu_custom_call.1} parent=11 // pred_region
          _
        $region28: #{tpu_custom_call.1} parent=11 // pred_fallthru
          _
      $region12: #{tpu_custom_call.1} parent=5 // pred_fallthru
        _
      %p178 = scmp.lt.s32.totalorder %s15, 2
      // Predicated region
      $region29: #{tpu_custom_call.1} parent=5 // pred_check
        %p179 = pneg %p178
      $region30: #{tpu_custom_call.1} parent=5 // pred_check_branch
        %181 = sbr.rel (%p179) target = $region32
      $region31: #{tpu_custom_call.1} parent=5 // pred_region
        // Predicated region
        $region33: #{tpu_custom_call.1} parent=31 // pred_check
          %p182 = pneg %p35
        $region34: #{tpu_custom_call.1} parent=31 // pred_check_branch
          %184 = sbr.rel (%p182) target = $region36
        $region35: #{tpu_custom_call.1} parent=31 // pred_region
          %p185 = scmp.lt.s32.totalorder %s15, 1
          %s186 = scalar_select %p185, %s15, 1
          %s187 = smul.addr %s186, 8
          %s188 = scalar_lea.vmem %s0, %s187
        $region36: #{tpu_custom_call.1} parent=31 // pred_fallthru
          _
      $region32: #{tpu_custom_call.1} parent=5 // pred_fallthru
        _
      %p189 = scmp.le.s32.totalorder 1, %s15
      %p190 = scmp.lt.s32.totalorder %s15, 3
      %p191 = pnand %p189, %p190
      %p192 = pneg %p191
      // Predicated region
      $region37: #{tpu_custom_call.1} parent=5 // pred_check
        _
      $region38: #{tpu_custom_call.1} parent=5 // pred_check_branch
        %194 = sbr.rel (%p191) target = $region40
      $region39: #{tpu_custom_call.1} parent=5 // pred_region
        %s195 = ssub.s32 %s15, 1
        %p196 = scmp.lt.s32.totalorder %s20, 1
        %s197 = scalar_select %p196, %s20, 1
        %s198 = smul.addr %s197, 8
        %s199 = scalar_lea.vmem %s0, %s198
        %p200 = pneg %p41
        %p201 = pneg %p38
        %p202 = pneg %p62
        %p203 = pneg %p59
        %p204 = pneg %p83
        %p205 = pneg %p80
        %p206 = pneg %p104
        %p207 = pneg %p101
        %p208 = pneg %p125
        %p209 = pneg %p122
        %p210 = pneg %p151
        %p211 = pneg %p148
        %s212 = sand.u32 %s138, 1
        %s213 = scalar_lea.sflag [#allocation4], %s212
        %s214 = sand.u32 %s138, 1
        %s215 = smul.addr %s214, 8
        %s216 = scalar_lea.vmem [#allocation3], %s215
        %p217 = scmp.lt.s32.totalorder %s20, 1
        %s218 = scalar_select %p217, %s20, 1
        %s219 = smul.addr %s218, 8
        %s220 = scalar_lea.vmem %s0, %s219
        %v221 = vld [vmem:[%s220] sm:$0xff]
        %v222 = vld [vmem:[%s1] sm:$0xff]
        %v223 = vld [vmem:[%s1 + $0x8] sm:$0xff]
        %v224 = vld [vmem:[%s1 + $0x10] sm:$0xff]
        %v225 = vld [vmem:[%s1 + $0x18] sm:$0xff]
        %v226 = vld [vmem:[%s1 + $0x20] sm:$0xff]
        %v227 = vld [vmem:[%s1 + $0x28] sm:$0xff]
        %v228 = vld [vmem:[%s1 + $0x30] sm:$0xff]
        %v229 = vld [vmem:[%s1 + $0x38] sm:$0xff]
        %v230 = vld [vmem:[%s1 + $0x40] sm:$0xff]
        %v231 = vld [vmem:[%s1 + $0x48] sm:$0xff]
        %v232 = vld [vmem:[%s1 + $0x50] sm:$0xff]
        %v233 = vld [vmem:[%s1 + $0x58] sm:$0xff]
        %v234 = vld [vmem:[%s1 + $0x60] sm:$0xff]
        %v235 = vld [vmem:[%s1 + $0x68] sm:$0xff]
        %v236 = vld [vmem:[%s1 + $0x70] sm:$0xff]
        %v237 = vld [vmem:[%s1 + $0x78] sm:$0xff]
        %v238 = vld [vmem:[%s1 + $0x80] sm:$0xff]
        %v239 = vld [vmem:[%s1 + $0x88] sm:$0xff]
        %v240 = vld [vmem:[%s1 + $0x90] sm:$0xff]
        %v241 = vld [vmem:[%s1 + $0x98] sm:$0xff]
        %v242 = vld [vmem:[%s1 + $0xa0] sm:$0xff]
        %v243 = vld [vmem:[%s1 + $0xa8] sm:$0xff]
        %v244 = vld [vmem:[%s1 + $0xb0] sm:$0xff]
        %v245 = vld [vmem:[%s1 + $0xb8] sm:$0xff]
        %v246 = vld [vmem:[%s1 + $0xc0] sm:$0xff]
        %v247 = vld [vmem:[%s1 + $0xc8] sm:$0xff]
        %v248 = vld [vmem:[%s1 + $0xd0] sm:$0xff]
        %v249 = vld [vmem:[%s1 + $0xd8] sm:$0xff]
        %v250 = vld [vmem:[%s1 + $0xe0] sm:$0xff]
        %v251 = vld [vmem:[%s1 + $0xe8] sm:$0xff]
        %v252 = vld [vmem:[%s1 + $0xf0] sm:$0xff]
        %v253 = vld [vmem:[%s1 + $0xf8] sm:$0xff]
        %v254 = vld [vmem:[%s1 + $0x100] sm:$0xff]
        %v255 = vld [vmem:[%s1 + $0x108] sm:$0xff]
        %v256 = vld [vmem:[%s1 + $0x110] sm:$0xff]
        %v257 = vld [vmem:[%s1 + $0x118] sm:$0xff]
        %v258 = vld [vmem:[%s1 + $0x120] sm:$0xff]
        %v259 = vld [vmem:[%s1 + $0x128] sm:$0xff]
        %v260 = vld [vmem:[%s1 + $0x130] sm:$0xff]
        %v261 = vld [vmem:[%s1 + $0x138] sm:$0xff]
        %v262 = vld [vmem:[%s1 + $0x140] sm:$0xff]
        %v263 = vld [vmem:[%s1 + $0x148] sm:$0xff]
        %v264 = vld [vmem:[%s1 + $0x150] sm:$0xff]
        %v265 = vld [vmem:[%s1 + $0x158] sm:$0xff]
        %v266 = vld [vmem:[%s1 + $0x160] sm:$0xff]
        %v267 = vld [vmem:[%s1 + $0x168] sm:$0xff]
        %v268 = vld [vmem:[%s1 + $0x170] sm:$0xff]
        %v269 = vld [vmem:[%s1 + $0x178] sm:$0xff]
        %v270 = vld [vmem:[%s1 + $0x180] sm:$0xff]
        %v271 = vld [vmem:[%s1 + $0x188] sm:$0xff]
        %v272 = vld [vmem:[%s1 + $0x190] sm:$0xff]
        %v273 = vld [vmem:[%s1 + $0x198] sm:$0xff]
        %v274 = vld [vmem:[%s1 + $0x1a0] sm:$0xff]
        %v275 = vld [vmem:[%s1 + $0x1a8] sm:$0xff]
        %v276 = vld [vmem:[%s1 + $0x1b0] sm:$0xff]
        %v277 = vld [vmem:[%s1 + $0x1b8] sm:$0xff]
        %v278 = vld [vmem:[%s1 + $0x1c0] sm:$0xff]
        %v279 = vld [vmem:[%s1 + $0x1c8] sm:$0xff]
        %v280 = vld [vmem:[%s1 + $0x1d0] sm:$0xff]
        %v281 = vld [vmem:[%s1 + $0x1d8] sm:$0xff]
        %v282 = vld [vmem:[%s1 + $0x1e0] sm:$0xff]
        %v283 = vld [vmem:[%s1 + $0x1e8] sm:$0xff]
        %v284 = vld [vmem:[%s1 + $0x1f0] sm:$0xff]
        %v285 = vld [vmem:[%s1 + $0x1f8] sm:$0xff]
        %v286 = vld [vmem:[%s1 + $0x200] sm:$0xff]
        %v287 = vld [vmem:[%s1 + $0x208] sm:$0xff]
        %v288 = vld [vmem:[%s1 + $0x210] sm:$0xff]
        %v289 = vld [vmem:[%s1 + $0x218] sm:$0xff]
        %v290 = vld [vmem:[%s1 + $0x220] sm:$0xff]
        %v291 = vld [vmem:[%s1 + $0x228] sm:$0xff]
        %v292 = vld [vmem:[%s1 + $0x230] sm:$0xff]
        %v293 = vld [vmem:[%s1 + $0x238] sm:$0xff]
        %v294 = vld [vmem:[%s1 + $0x240] sm:$0xff]
        %v295 = vld [vmem:[%s1 + $0x248] sm:$0xff]
        %v296 = vld [vmem:[%s1 + $0x250] sm:$0xff]
        %v297 = vld [vmem:[%s1 + $0x258] sm:$0xff]
        %v298 = vld [vmem:[%s1 + $0x260] sm:$0xff]
        %v299 = vld [vmem:[%s1 + $0x268] sm:$0xff]
        %v300 = vld [vmem:[%s1 + $0x270] sm:$0xff]
        %v301 = vld [vmem:[%s1 + $0x278] sm:$0xff]
        %v302 = vld [vmem:[%s1 + $0x280] sm:$0xff]
        %v303 = vld [vmem:[%s1 + $0x288] sm:$0xff]
        %v304 = vld [vmem:[%s1 + $0x290] sm:$0xff]
        %v305 = vld [vmem:[%s1 + $0x298] sm:$0xff]
        %v306 = vld [vmem:[%s1 + $0x2a0] sm:$0xff]
        %v307 = vld [vmem:[%s1 + $0x2a8] sm:$0xff]
        %v308 = vld [vmem:[%s1 + $0x2b0] sm:$0xff]
        %v309 = vld [vmem:[%s1 + $0x2b8] sm:$0xff]
        %v310 = vld [vmem:[%s1 + $0x2c0] sm:$0xff]
        %v311 = vld [vmem:[%s1 + $0x2c8] sm:$0xff]
        %v312 = vld [vmem:[%s1 + $0x2d0] sm:$0xff]
        %v313 = vld [vmem:[%s1 + $0x2d8] sm:$0xff]
        %v314 = vld [vmem:[%s1 + $0x2e0] sm:$0xff]
        %v315 = vld [vmem:[%s1 + $0x2e8] sm:$0xff]
        %v316 = vld [vmem:[%s1 + $0x2f0] sm:$0xff]
        %v317 = vld [vmem:[%s1 + $0x2f8] sm:$0xff]
        %v318 = vld [vmem:[%s1 + $0x300] sm:$0xff]
        %v319 = vld [vmem:[%s1 + $0x308] sm:$0xff]
        %v320 = vld [vmem:[%s1 + $0x310] sm:$0xff]
        %v321 = vld [vmem:[%s1 + $0x318] sm:$0xff]
        %v322 = vld [vmem:[%s1 + $0x320] sm:$0xff]
        %v323 = vld [vmem:[%s1 + $0x328] sm:$0xff]
        %v324 = vld [vmem:[%s1 + $0x330] sm:$0xff]
        %v325 = vld [vmem:[%s1 + $0x338] sm:$0xff]
        %v326 = vld [vmem:[%s1 + $0x340] sm:$0xff]
        %v327 = vld [vmem:[%s1 + $0x348] sm:$0xff]
        %v328 = vld [vmem:[%s1 + $0x350] sm:$0xff]
        %v329 = vld [vmem:[%s1 + $0x358] sm:$0xff]
        %v330 = vld [vmem:[%s1 + $0x360] sm:$0xff]
        %v331 = vld [vmem:[%s1 + $0x368] sm:$0xff]
        %v332 = vld [vmem:[%s1 + $0x370] sm:$0xff]
        %v333 = vld [vmem:[%s1 + $0x378] sm:$0xff]
        %v334 = vld [vmem:[%s1 + $0x380] sm:$0xff]
        %v335 = vld [vmem:[%s1 + $0x388] sm:$0xff]
        %v336 = vld [vmem:[%s1 + $0x390] sm:$0xff]
        %v337 = vld [vmem:[%s1 + $0x398] sm:$0xff]
        %v338 = vld [vmem:[%s1 + $0x3a0] sm:$0xff]
        %v339 = vld [vmem:[%s1 + $0x3a8] sm:$0xff]
        %v340 = vld [vmem:[%s1 + $0x3b0] sm:$0xff]
        %v341 = vld [vmem:[%s1 + $0x3b8] sm:$0xff]
        %v342 = vld [vmem:[%s1 + $0x3c0] sm:$0xff]
        %v343 = vld [vmem:[%s1 + $0x3c8] sm:$0xff]
        %v344 = vld [vmem:[%s1 + $0x3d0] sm:$0xff]
        %v345 = vld [vmem:[%s1 + $0x3d8] sm:$0xff]
        %v346 = vld [vmem:[%s1 + $0x3e0] sm:$0xff]
        %v347 = vld [vmem:[%s1 + $0x3e8] sm:$0xff]
        %v348 = vld [vmem:[%s1 + $0x3f0] sm:$0xff]
        %v349 = vld [vmem:[%s1 + $0x3f8] sm:$0xff]
        %v350 = vld [vmem:[%s2] sm:$0xff]
        %v352 = vperm.slane %v350, 0
        %v353 = vperm.slane %v350, 1
        %v354 = vperm.slane %v350, 2
        %v355 = vperm.slane %v350, 3
        %v356 = vperm.slane %v350, 4
        %v357 = vperm.slane %v350, 5
        %v358 = vperm.slane %v350, 6
        %v359 = vperm.slane %v350, 7
        %368 = vmatpush.msra.mxu0 %v342
        %369 = vmatpush.msra.mxu0 %v334
        %370 = vmatpush.msra.mxu0 %v326
        %371 = vmatpush.msra.mxu0 %v318
        %372 = vmatpush.msra.mxu0 %v310
        %373 = vmatpush.msra.mxu0 %v302
        %374 = vmatpush.msra.mxu0 %v294
        %375 = vmatpush.msra.mxu0 %v286
        %376 = vmatpush.msra.mxu0 %v278
        %377 = vmatpush.msra.mxu0 %v270
        %378 = vmatpush.msra.mxu0 %v262
        %379 = vmatpush.msra.mxu0 %v254
        %380 = vmatpush.msra.mxu0 %v246
        %381 = vmatpush.msra.mxu0 %v238
        %382 = vmatpush.msra.mxu0 %v230
        %383 = vmatpush.msra.mxu0 %v222
        %384 = vmatmul.f32.gmra.mxu0 %v221
        %v385 = vpop.f32.mrf.mxu0
        %v386 = vadd.f32 %v352, %v385
        %387 = vdwg.mxu0
        %388 = vmatpush.msra.mxu0 %v343
        %389 = vmatpush.msra.mxu0 %v335
        %390 = vmatpush.msra.mxu0 %v327
        %391 = vmatpush.msra.mxu0 %v319
        %392 = vmatpush.msra.mxu0 %v311
        %393 = vmatpush.msra.mxu0 %v303
        %394 = vmatpush.msra.mxu0 %v295
        %395 = vmatpush.msra.mxu0 %v287
        %396 = vmatpush.msra.mxu0 %v279
        %397 = vmatpush.msra.mxu0 %v271
        %398 = vmatpush.msra.mxu0 %v263
        %399 = vmatpush.msra.mxu0 %v255
        %400 = vmatpush.msra.mxu0 %v247
        %401 = vmatpush.msra.mxu0 %v239
        %402 = vmatpush.msra.mxu0 %v231
        %403 = vmatpush.msra.mxu0 %v223
        %404 = vmatmul.f32.gmra.mxu0 %v221
        %v405 = vpop.f32.mrf.mxu0
        %v406 = vadd.f32 %v353, %v405
        %407 = vdwg.mxu0
        %408 = vmatpush.msra.mxu0 %v344
        %409 = vmatpush.msra.mxu0 %v336
        %410 = vmatpush.msra.mxu0 %v328
        %411 = vmatpush.msra.mxu0 %v320
        %412 = vmatpush.msra.mxu0 %v312
        %413 = vmatpush.msra.mxu0 %v304
        %414 = vmatpush.msra.mxu0 %v296
        %415 = vmatpush.msra.mxu0 %v288
        %416 = vmatpush.msra.mxu0 %v280
        %417 = vmatpush.msra.mxu0 %v272
        %418 = vmatpush.msra.mxu0 %v264
        %419 = vmatpush.msra.mxu0 %v256
        %420 = vmatpush.msra.mxu0 %v248
        %421 = vmatpush.msra.mxu0 %v240
        %422 = vmatpush.msra.mxu0 %v232
        %423 = vmatpush.msra.mxu0 %v224
        %424 = vmatmul.f32.gmra.mxu0 %v221
        %v425 = vpop.f32.mrf.mxu0
        %v426 = vadd.f32 %v354, %v425
        %427 = vdwg.mxu0
        %428 = vmatpush.msra.mxu0 %v345
        %429 = vmatpush.msra.mxu0 %v337
        %430 = vmatpush.msra.mxu0 %v329
        %431 = vmatpush.msra.mxu0 %v321
        %432 = vmatpush.msra.mxu0 %v313
        %433 = vmatpush.msra.mxu0 %v305
        %434 = vmatpush.msra.mxu0 %v297
        %435 = vmatpush.msra.mxu0 %v289
        %436 = vmatpush.msra.mxu0 %v281
        %437 = vmatpush.msra.mxu0 %v273
        %438 = vmatpush.msra.mxu0 %v265
        %439 = vmatpush.msra.mxu0 %v257
        %440 = vmatpush.msra.mxu0 %v249
        %441 = vmatpush.msra.mxu0 %v241
        %442 = vmatpush.msra.mxu0 %v233
        %443 = vmatpush.msra.mxu0 %v225
        %444 = vmatmul.f32.gmra.mxu0 %v221
        %v445 = vpop.f32.mrf.mxu0
        %v446 = vadd.f32 %v355, %v445
        %447 = vdwg.mxu0
        %448 = vmatpush.msra.mxu0 %v346
        %449 = vmatpush.msra.mxu0 %v338
        %450 = vmatpush.msra.mxu0 %v330
        %451 = vmatpush.msra.mxu0 %v322
        %452 = vmatpush.msra.mxu0 %v314
        %453 = vmatpush.msra.mxu0 %v306
        %454 = vmatpush.msra.mxu0 %v298
        %455 = vmatpush.msra.mxu0 %v290
        %456 = vmatpush.msra.mxu0 %v282
        %457 = vmatpush.msra.mxu0 %v274
        %458 = vmatpush.msra.mxu0 %v266
        %459 = vmatpush.msra.mxu0 %v258
        %460 = vmatpush.msra.mxu0 %v250
        %461 = vmatpush.msra.mxu0 %v242
        %462 = vmatpush.msra.mxu0 %v234
        %463 = vmatpush.msra.mxu0 %v226
        %464 = vmatmul.f32.gmra.mxu0 %v221
        %v465 = vpop.f32.mrf.mxu0
        %v466 = vadd.f32 %v356, %v465
        %467 = vdwg.mxu0
        %468 = vmatpush.msra.mxu0 %v347
        %469 = vmatpush.msra.mxu0 %v339
        %470 = vmatpush.msra.mxu0 %v331
        %471 = vmatpush.msra.mxu0 %v323
        %472 = vmatpush.msra.mxu0 %v315
        %473 = vmatpush.msra.mxu0 %v307
        %474 = vmatpush.msra.mxu0 %v299
        %475 = vmatpush.msra.mxu0 %v291
        %476 = vmatpush.msra.mxu0 %v283
        %477 = vmatpush.msra.mxu0 %v275
        %478 = vmatpush.msra.mxu0 %v267
        %479 = vmatpush.msra.mxu0 %v259
        %480 = vmatpush.msra.mxu0 %v251
        %481 = vmatpush.msra.mxu0 %v243
        %482 = vmatpush.msra.mxu0 %v235
        %483 = vmatpush.msra.mxu0 %v227
        %484 = vmatmul.f32.gmra.mxu0 %v221
        %v485 = vpop.f32.mrf.mxu0
        %v486 = vadd.f32 %v357, %v485
        %487 = vdwg.mxu0
        %488 = vmatpush.msra.mxu0 %v348
        %489 = vmatpush.msra.mxu0 %v340
        %490 = vmatpush.msra.mxu0 %v332
        %491 = vmatpush.msra.mxu0 %v324
        %492 = vmatpush.msra.mxu0 %v316
        %493 = vmatpush.msra.mxu0 %v308
        %494 = vmatpush.msra.mxu0 %v300
        %495 = vmatpush.msra.mxu0 %v292
        %496 = vmatpush.msra.mxu0 %v284
        %497 = vmatpush.msra.mxu0 %v276
        %498 = vmatpush.msra.mxu0 %v268
        %499 = vmatpush.msra.mxu0 %v260
        %500 = vmatpush.msra.mxu0 %v252
        %501 = vmatpush.msra.mxu0 %v244
        %502 = vmatpush.msra.mxu0 %v236
        %503 = vmatpush.msra.mxu0 %v228
        %504 = vmatmul.f32.gmra.mxu0 %v221
        %v505 = vpop.f32.mrf.mxu0
        %v506 = vadd.f32 %v358, %v505
        %507 = vdwg.mxu0
        %508 = vmatpush.msra.mxu0 %v349
        %509 = vmatpush.msra.mxu0 %v341
        %510 = vmatpush.msra.mxu0 %v333
        %511 = vmatpush.msra.mxu0 %v325
        %512 = vmatpush.msra.mxu0 %v317
        %513 = vmatpush.msra.mxu0 %v309
        %514 = vmatpush.msra.mxu0 %v301
        %515 = vmatpush.msra.mxu0 %v293
        %516 = vmatpush.msra.mxu0 %v285
        %517 = vmatpush.msra.mxu0 %v277
        %518 = vmatpush.msra.mxu0 %v269
        %519 = vmatpush.msra.mxu0 %v261
        %520 = vmatpush.msra.mxu0 %v253
        %521 = vmatpush.msra.mxu0 %v245
        %522 = vmatpush.msra.mxu0 %v237
        %523 = vmatpush.msra.mxu0 %v229
        %524 = vmatmul.f32.gmra.mxu0 %v221
        %v525 = vpop.f32.mrf.mxu0
        %v526 = vadd.f32 %v359, %v525
        %527 = vdwg.mxu0
        %v528 = vmax.f32 %v386, 0.0
        %v529 = vmax.f32 %v406, 0.0
        %v530 = vmax.f32 %v426, 0.0
        %v531 = vmax.f32 %v446, 0.0
        %v532 = vmax.f32 %v466, 0.0
        %v533 = vmax.f32 %v486, 0.0
        %v534 = vmax.f32 %v506, 0.0
        %v535 = vmax.f32 %v526, 0.0
        %v536 = vld [vmem:[%s3] sm:$0xff]
        %v537 = vld [vmem:[%s3 + $0x8] sm:$0xff]
        %v538 = vld [vmem:[%s3 + $0x10] sm:$0xff]
        %v539 = vld [vmem:[%s3 + $0x18] sm:$0xff]
        %v540 = vld [vmem:[%s3 + $0x20] sm:$0xff]
        %v541 = vld [vmem:[%s3 + $0x28] sm:$0xff]
        %v542 = vld [vmem:[%s3 + $0x30] sm:$0xff]
        %v543 = vld [vmem:[%s3 + $0x38] sm:$0xff]
        %v544 = vld [vmem:[%s3 + $0x40] sm:$0xff]
        %v545 = vld [vmem:[%s3 + $0x48] sm:$0xff]
        %v546 = vld [vmem:[%s3 + $0x50] sm:$0xff]
        %v547 = vld [vmem:[%s3 + $0x58] sm:$0xff]
        %v548 = vld [vmem:[%s3 + $0x60] sm:$0xff]
        %v549 = vld [vmem:[%s3 + $0x68] sm:$0xff]
        %v550 = vld [vmem:[%s3 + $0x70] sm:$0xff]
        %v551 = vld [vmem:[%s3 + $0x78] sm:$0xff]
        %v552 = vld [vmem:[%s3 + $0x80] sm:$0xff]
        %v553 = vld [vmem:[%s3 + $0x88] sm:$0xff]
        %v554 = vld [vmem:[%s3 + $0x90] sm:$0xff]
        %v555 = vld [vmem:[%s3 + $0x98] sm:$0xff]
        %v556 = vld [vmem:[%s3 + $0xa0] sm:$0xff]
        %v557 = vld [vmem:[%s3 + $0xa8] sm:$0xff]
        %v558 = vld [vmem:[%s3 + $0xb0] sm:$0xff]
        %v559 = vld [vmem:[%s3 + $0xb8] sm:$0xff]
        %v560 = vld [vmem:[%s3 + $0xc0] sm:$0xff]
        %v561 = vld [vmem:[%s3 + $0xc8] sm:$0xff]
        %v562 = vld [vmem:[%s3 + $0xd0] sm:$0xff]
        %v563 = vld [vmem:[%s3 + $0xd8] sm:$0xff]
        %v564 = vld [vmem:[%s3 + $0xe0] sm:$0xff]
        %v565 = vld [vmem:[%s3 + $0xe8] sm:$0xff]
        %v566 = vld [vmem:[%s3 + $0xf0] sm:$0xff]
        %v567 = vld [vmem:[%s3 + $0xf8] sm:$0xff]
        %v568 = vld [vmem:[%s3 + $0x100] sm:$0xff]
        %v569 = vld [vmem:[%s3 + $0x108] sm:$0xff]
        %v570 = vld [vmem:[%s3 + $0x110] sm:$0xff]
        %v571 = vld [vmem:[%s3 + $0x118] sm:$0xff]
        %v572 = vld [vmem:[%s3 + $0x120] sm:$0xff]
        %v573 = vld [vmem:[%s3 + $0x128] sm:$0xff]
        %v574 = vld [vmem:[%s3 + $0x130] sm:$0xff]
        %v575 = vld [vmem:[%s3 + $0x138] sm:$0xff]
        %v576 = vld [vmem:[%s3 + $0x140] sm:$0xff]
        %v577 = vld [vmem:[%s3 + $0x148] sm:$0xff]
        %v578 = vld [vmem:[%s3 + $0x150] sm:$0xff]
        %v579 = vld [vmem:[%s3 + $0x158] sm:$0xff]
        %v580 = vld [vmem:[%s3 + $0x160] sm:$0xff]
        %v581 = vld [vmem:[%s3 + $0x168] sm:$0xff]
        %v582 = vld [vmem:[%s3 + $0x170] sm:$0xff]
        %v583 = vld [vmem:[%s3 + $0x178] sm:$0xff]
        %v584 = vld [vmem:[%s3 + $0x180] sm:$0xff]
        %v585 = vld [vmem:[%s3 + $0x188] sm:$0xff]
        %v586 = vld [vmem:[%s3 + $0x190] sm:$0xff]
        %v587 = vld [vmem:[%s3 + $0x198] sm:$0xff]
        %v588 = vld [vmem:[%s3 + $0x1a0] sm:$0xff]
        %v589 = vld [vmem:[%s3 + $0x1a8] sm:$0xff]
        %v590 = vld [vmem:[%s3 + $0x1b0] sm:$0xff]
        %v591 = vld [vmem:[%s3 + $0x1b8] sm:$0xff]
        %v592 = vld [vmem:[%s3 + $0x1c0] sm:$0xff]
        %v593 = vld [vmem:[%s3 + $0x1c8] sm:$0xff]
        %v594 = vld [vmem:[%s3 + $0x1d0] sm:$0xff]
        %v595 = vld [vmem:[%s3 + $0x1d8] sm:$0xff]
        %v596 = vld [vmem:[%s3 + $0x1e0] sm:$0xff]
        %v597 = vld [vmem:[%s3 + $0x1e8] sm:$0xff]
        %v598 = vld [vmem:[%s3 + $0x1f0] sm:$0xff]
        %v599 = vld [vmem:[%s3 + $0x1f8] sm:$0xff]
        %v600 = vld [vmem:[%s3 + $0x200] sm:$0xff]
        %v601 = vld [vmem:[%s3 + $0x208] sm:$0xff]
        %v602 = vld [vmem:[%s3 + $0x210] sm:$0xff]
        %v603 = vld [vmem:[%s3 + $0x218] sm:$0xff]
        %v604 = vld [vmem:[%s3 + $0x220] sm:$0xff]
        %v605 = vld [vmem:[%s3 + $0x228] sm:$0xff]
        %v606 = vld [vmem:[%s3 + $0x230] sm:$0xff]
        %v607 = vld [vmem:[%s3 + $0x238] sm:$0xff]
        %v608 = vld [vmem:[%s3 + $0x240] sm:$0xff]
        %v609 = vld [vmem:[%s3 + $0x248] sm:$0xff]
        %v610 = vld [vmem:[%s3 + $0x250] sm:$0xff]
        %v611 = vld [vmem:[%s3 + $0x258] sm:$0xff]
        %v612 = vld [vmem:[%s3 + $0x260] sm:$0xff]
        %v613 = vld [vmem:[%s3 + $0x268] sm:$0xff]
        %v614 = vld [vmem:[%s3 + $0x270] sm:$0xff]
        %v615 = vld [vmem:[%s3 + $0x278] sm:$0xff]
        %v616 = vld [vmem:[%s3 + $0x280] sm:$0xff]
        %v617 = vld [vmem:[%s3 + $0x288] sm:$0xff]
        %v618 = vld [vmem:[%s3 + $0x290] sm:$0xff]
        %v619 = vld [vmem:[%s3 + $0x298] sm:$0xff]
        %v620 = vld [vmem:[%s3 + $0x2a0] sm:$0xff]
        %v621 = vld [vmem:[%s3 + $0x2a8] sm:$0xff]
        %v622 = vld [vmem:[%s3 + $0x2b0] sm:$0xff]
        %v623 = vld [vmem:[%s3 + $0x2b8] sm:$0xff]
        %v624 = vld [vmem:[%s3 + $0x2c0] sm:$0xff]
        %v625 = vld [vmem:[%s3 + $0x2c8] sm:$0xff]
        %v626 = vld [vmem:[%s3 + $0x2d0] sm:$0xff]
        %v627 = vld [vmem:[%s3 + $0x2d8] sm:$0xff]
        %v628 = vld [vmem:[%s3 + $0x2e0] sm:$0xff]
        %v629 = vld [vmem:[%s3 + $0x2e8] sm:$0xff]
        %v630 = vld [vmem:[%s3 + $0x2f0] sm:$0xff]
        %v631 = vld [vmem:[%s3 + $0x2f8] sm:$0xff]
        %v632 = vld [vmem:[%s3 + $0x300] sm:$0xff]
        %v633 = vld [vmem:[%s3 + $0x308] sm:$0xff]
        %v634 = vld [vmem:[%s3 + $0x310] sm:$0xff]
        %v635 = vld [vmem:[%s3 + $0x318] sm:$0xff]
        %v636 = vld [vmem:[%s3 + $0x320] sm:$0xff]
        %v637 = vld [vmem:[%s3 + $0x328] sm:$0xff]
        %v638 = vld [vmem:[%s3 + $0x330] sm:$0xff]
        %v639 = vld [vmem:[%s3 + $0x338] sm:$0xff]
        %v640 = vld [vmem:[%s3 + $0x340] sm:$0xff]
        %v641 = vld [vmem:[%s3 + $0x348] sm:$0xff]
        %v642 = vld [vmem:[%s3 + $0x350] sm:$0xff]
        %v643 = vld [vmem:[%s3 + $0x358] sm:$0xff]
        %v644 = vld [vmem:[%s3 + $0x360] sm:$0xff]
        %v645 = vld [vmem:[%s3 + $0x368] sm:$0xff]
        %v646 = vld [vmem:[%s3 + $0x370] sm:$0xff]
        %v647 = vld [vmem:[%s3 + $0x378] sm:$0xff]
        %v648 = vld [vmem:[%s3 + $0x380] sm:$0xff]
        %v649 = vld [vmem:[%s3 + $0x388] sm:$0xff]
        %v650 = vld [vmem:[%s3 + $0x390] sm:$0xff]
        %v651 = vld [vmem:[%s3 + $0x398] sm:$0xff]
        %v652 = vld [vmem:[%s3 + $0x3a0] sm:$0xff]
        %v653 = vld [vmem:[%s3 + $0x3a8] sm:$0xff]
        %v654 = vld [vmem:[%s3 + $0x3b0] sm:$0xff]
        %v655 = vld [vmem:[%s3 + $0x3b8] sm:$0xff]
        %v656 = vld [vmem:[%s3 + $0x3c0] sm:$0xff]
        %v657 = vld [vmem:[%s3 + $0x3c8] sm:$0xff]
        %v658 = vld [vmem:[%s3 + $0x3d0] sm:$0xff]
        %v659 = vld [vmem:[%s3 + $0x3d8] sm:$0xff]
        %v660 = vld [vmem:[%s3 + $0x3e0] sm:$0xff]
        %v661 = vld [vmem:[%s3 + $0x3e8] sm:$0xff]
        %v662 = vld [vmem:[%s3 + $0x3f0] sm:$0xff]
        %v663 = vld [vmem:[%s3 + $0x3f8] sm:$0xff]
        %s664 = sld [smem:[#allocation2]]
        %v665 = vstv %s664
        %666 = vmatpush.msra.mxu0 %v551
        %667 = vmatpush.msra.mxu0 %v550
        %668 = vmatpush.msra.mxu0 %v549
        %669 = vmatpush.msra.mxu0 %v548
        %670 = vmatpush.msra.mxu0 %v547
        %671 = vmatpush.msra.mxu0 %v546
        %672 = vmatpush.msra.mxu0 %v545
        %673 = vmatpush.msra.mxu0 %v544
        %674 = vmatpush.msra.mxu0 %v543
        %675 = vmatpush.msra.mxu0 %v542
        %676 = vmatpush.msra.mxu0 %v541
        %677 = vmatpush.msra.mxu0 %v540
        %678 = vmatpush.msra.mxu0 %v539
        %679 = vmatpush.msra.mxu0 %v538
        %680 = vmatpush.msra.mxu0 %v537
        %681 = vmatpush.msra.mxu0 %v536
        %682 = vmatmul.f32.gmra.mxu0 %v528
        %v683 = vpop.f32.mrf.mxu0
        %v684 = vadd.f32 %v665, %v683
        %685 = vdwg.mxu0
        %686 = vmatpush.msra.mxu0 %v567
        %687 = vmatpush.msra.mxu0 %v566
        %688 = vmatpush.msra.mxu0 %v565
        %689 = vmatpush.msra.mxu0 %v564
        %690 = vmatpush.msra.mxu0 %v563
        %691 = vmatpush.msra.mxu0 %v562
        %692 = vmatpush.msra.mxu0 %v561
        %693 = vmatpush.msra.mxu0 %v560
        %694 = vmatpush.msra.mxu0 %v559
        %695 = vmatpush.msra.mxu0 %v558
        %696 = vmatpush.msra.mxu0 %v557
        %697 = vmatpush.msra.mxu0 %v556
        %698 = vmatpush.msra.mxu0 %v555
        %699 = vmatpush.msra.mxu0 %v554
        %700 = vmatpush.msra.mxu0 %v553
        %701 = vmatpush.msra.mxu0 %v552
        %702 = vmatmul.f32.gmra.mxu0 %v529
        %v703 = vpop.f32.mrf.mxu0
        %v704 = vadd.f32 %v684, %v703
        %705 = vdwg.mxu0
        %706 = vmatpush.msra.mxu0 %v583
        %707 = vmatpush.msra.mxu0 %v582
        %708 = vmatpush.msra.mxu0 %v581
        %709 = vmatpush.msra.mxu0 %v580
        %710 = vmatpush.msra.mxu0 %v579
        %711 = vmatpush.msra.mxu0 %v578
        %712 = vmatpush.msra.mxu0 %v577
        %713 = vmatpush.msra.mxu0 %v576
        %714 = vmatpush.msra.mxu0 %v575
        %715 = vmatpush.msra.mxu0 %v574
        %716 = vmatpush.msra.mxu0 %v573
        %717 = vmatpush.msra.mxu0 %v572
        %718 = vmatpush.msra.mxu0 %v571
        %719 = vmatpush.msra.mxu0 %v570
        %720 = vmatpush.msra.mxu0 %v569
        %721 = vmatpush.msra.mxu0 %v568
        %722 = vmatmul.f32.gmra.mxu0 %v530
        %v723 = vpop.f32.mrf.mxu0
        %v724 = vadd.f32 %v704, %v723
        %725 = vdwg.mxu0
        %726 = vmatpush.msra.mxu0 %v599
        %727 = vmatpush.msra.mxu0 %v598
        %728 = vmatpush.msra.mxu0 %v597
        %729 = vmatpush.msra.mxu0 %v596
        %730 = vmatpush.msra.mxu0 %v595
        %731 = vmatpush.msra.mxu0 %v594
        %732 = vmatpush.msra.mxu0 %v593
        %733 = vmatpush.msra.mxu0 %v592
        %734 = vmatpush.msra.mxu0 %v591
        %735 = vmatpush.msra.mxu0 %v590
        %736 = vmatpush.msra.mxu0 %v589
        %737 = vmatpush.msra.mxu0 %v588
        %738 = vmatpush.msra.mxu0 %v587
        %739 = vmatpush.msra.mxu0 %v586
        %740 = vmatpush.msra.mxu0 %v585
        %741 = vmatpush.msra.mxu0 %v584
        %742 = vmatmul.f32.gmra.mxu0 %v531
        %v743 = vpop.f32.mrf.mxu0
        %v744 = vadd.f32 %v724, %v743
        %745 = vdwg.mxu0
        %746 = vmatpush.msra.mxu0 %v615
        %747 = vmatpush.msra.mxu0 %v614
        %748 = vmatpush.msra.mxu0 %v613
        %749 = vmatpush.msra.mxu0 %v612
        %750 = vmatpush.msra.mxu0 %v611
        %751 = vmatpush.msra.mxu0 %v610
        %752 = vmatpush.msra.mxu0 %v609
        %753 = vmatpush.msra.mxu0 %v608
        %754 = vmatpush.msra.mxu0 %v607
        %755 = vmatpush.msra.mxu0 %v606
        %756 = vmatpush.msra.mxu0 %v605
        %757 = vmatpush.msra.mxu0 %v604
        %758 = vmatpush.msra.mxu0 %v603
        %759 = vmatpush.msra.mxu0 %v602
        %760 = vmatpush.msra.mxu0 %v601
        %761 = vmatpush.msra.mxu0 %v600
        %762 = vmatmul.f32.gmra.mxu0 %v532
        %v763 = vpop.f32.mrf.mxu0
        %v764 = vadd.f32 %v744, %v763
        %765 = vdwg.mxu0
        %766 = vmatpush.msra.mxu0 %v631
        %767 = vmatpush.msra.mxu0 %v630
        %768 = vmatpush.msra.mxu0 %v629
        %769 = vmatpush.msra.mxu0 %v628
        %770 = vmatpush.msra.mxu0 %v627
        %771 = vmatpush.msra.mxu0 %v626
        %772 = vmatpush.msra.mxu0 %v625
        %773 = vmatpush.msra.mxu0 %v624
        %774 = vmatpush.msra.mxu0 %v623
        %775 = vmatpush.msra.mxu0 %v622
        %776 = vmatpush.msra.mxu0 %v621
        %777 = vmatpush.msra.mxu0 %v620
        %778 = vmatpush.msra.mxu0 %v619
        %779 = vmatpush.msra.mxu0 %v618
        %780 = vmatpush.msra.mxu0 %v617
        %781 = vmatpush.msra.mxu0 %v616
        %782 = vmatmul.f32.gmra.mxu0 %v533
        %v783 = vpop.f32.mrf.mxu0
        %v784 = vadd.f32 %v764, %v783
        %785 = vdwg.mxu0
        %786 = vmatpush.msra.mxu0 %v647
        %787 = vmatpush.msra.mxu0 %v646
        %788 = vmatpush.msra.mxu0 %v645
        %789 = vmatpush.msra.mxu0 %v644
        %790 = vmatpush.msra.mxu0 %v643
        %791 = vmatpush.msra.mxu0 %v642
        %792 = vmatpush.msra.mxu0 %v641
        %793 = vmatpush.msra.mxu0 %v640
        %794 = vmatpush.msra.mxu0 %v639
        %795 = vmatpush.msra.mxu0 %v638
        %796 = vmatpush.msra.mxu0 %v637
        %797 = vmatpush.msra.mxu0 %v636
        %798 = vmatpush.msra.mxu0 %v635
        %799 = vmatpush.msra.mxu0 %v634
        %800 = vmatpush.msra.mxu0 %v633
        %801 = vmatpush.msra.mxu0 %v632
        %802 = vmatmul.f32.gmra.mxu0 %v534
        %v803 = vpop.f32.mrf.mxu0
        %v804 = vadd.f32 %v784, %v803
        %805 = vdwg.mxu0
        %806 = vmatpush.msra.mxu0 %v663
        %807 = vmatpush.msra.mxu0 %v662
        %808 = vmatpush.msra.mxu0 %v661
        %809 = vmatpush.msra.mxu0 %v660
        %810 = vmatpush.msra.mxu0 %v659
        %811 = vmatpush.msra.mxu0 %v658
        %812 = vmatpush.msra.mxu0 %v657
        %813 = vmatpush.msra.mxu0 %v656
        %814 = vmatpush.msra.mxu0 %v655
        %815 = vmatpush.msra.mxu0 %v654
        %816 = vmatpush.msra.mxu0 %v653
        %817 = vmatpush.msra.mxu0 %v652
        %818 = vmatpush.msra.mxu0 %v651
        %819 = vmatpush.msra.mxu0 %v650
        %820 = vmatpush.msra.mxu0 %v649
        %821 = vmatpush.msra.mxu0 %v648
        %822 = vmatmul.f32.gmra.mxu0 %v535
        %v823 = vpop.f32.mrf.mxu0
        %v824 = vadd.f32 %v804, %v823
        %825 = vdwg.mxu0
        %vm826 = vcmask 130048
        %827 = vst.msk [vmem:[%s216] sm:$0xff] %vm826, %v824
        %s828 = sand.u32 %s138, 1
        %s829 = scalar_lea.sflag [#allocation4], %s828
        %s830 = sand.u32 %s138, 1
        %s831 = smul.addr %s830, 8
        %s832 = scalar_lea.vmem [#allocation3], %s831
        // Predicated region
        $region41: #{tpu_custom_call.1} parent=39 // pred_check
          %p833 = pneg %p148
        $region42: #{tpu_custom_call.1} parent=39 // pred_check_branch
          %835 = sbr.rel (%p833) target = $region44
        $region43: #{tpu_custom_call.1} parent=39 // pred_region
          %837 = vsyncadd %s829, 0
          %s838 = smul.addr %s20, 8
          %s839 = scalar_lea.hbm %s5, %s838
          %s841 = sshll.u32 %s832, 4
          %s842 = int_to_ptr.vmem [resolvable:$true] %s841
          %s843 = sshll.u32 %s839, 4
          %s844 = int_to_ptr.hbm [resolvable:$true] %s843
          %846 = dma.vmem_to_hbm [thread:$0]  %s842, 128, %s844, %s829
        $region44: #{tpu_custom_call.1} parent=39 // pred_fallthru
          _
      $region40: #{tpu_custom_call.1} parent=5 // pred_fallthru
        _
      %p847 = scmp.le.s32.totalorder 2, %s15
      // Predicated region
      $region45: #{tpu_custom_call.1} parent=5 // pred_check
        %p848 = pneg %p847
      $region46: #{tpu_custom_call.1} parent=5 // pred_check_branch
        %850 = sbr.rel (%p848) target = $region48
      $region47: #{tpu_custom_call.1} parent=5 // pred_region
        %s851 = ssub.s32 %s15, 2
        // Predicated region
        $region49: #{tpu_custom_call.1} parent=47 // pred_check
          %p852 = pneg %p154
        $region50: #{tpu_custom_call.1} parent=47 // pred_check_branch
          %854 = sbr.rel (%p852) target = $region52
        $region51: #{tpu_custom_call.1} parent=47 // pred_region
          %s855 = sand.u32 %s139, 1
          %s856 = scalar_lea.sflag [#allocation4], %s855
          %s857 = sand.u32 %s139, 1
          %s858 = smul.addr %s857, 8
          %s859 = scalar_lea.vmem [#allocation3], %s858
          %861 = dma.done %s856, 128
        $region52: #{tpu_custom_call.1} parent=47 // pred_fallthru
          _
      $region48: #{tpu_custom_call.1} parent=5 // pred_fallthru
        _
    $region6: #{tpu_custom_call.1} parent=1 // loop_footer
      %s19 = sadd.s32 1, %s15
    $region7: #{tpu_custom_call.1} parent=1 // loop_footer_branch
      %14 = sbr.rel target = $region3
    $region8: #{tpu_custom_call.1} parent=1 // loop_exit
      _
    %862 = vsyncpa [#allocation4], 1
    %s863 = scalar_lea.sflag [#allocation4], 1
    %864 = vsyncpa %s863, 1

</llo_original>
